<compile_context>
chip_gen: v7x
topology: tpu7x:2x2x1
jax: 0.10.0
libtpu: 0.0.40
codegen_flags: <defaults>
</compile_context>

<pallas_src>
import jax
import jax.numpy as jnp
from jax.experimental import pallas as pl
from jax.experimental.pallas import tpu as pltpu

_MXU = 256        # pad K/N to multiples of 256 on the tiled path (v6e/v7x MXU)
_MAX_TILE = 512   # cap for tm / tk / tn


def _round_up(x: int, m: int) -> int:
    return (x + m - 1) // m * m


def _sublane(dtype) -> int:
    # bf16 packs 2 rows per sublane -> use 16-row multiples; f32 -> 8.
    return 16 if jnp.dtype(dtype).itemsize == 2 else 8


# ----------------------------- kernels --------------------------------------


def _fa_linear_single_kernel(x_ref, w_ref, b_ref, o_ref):
    # One full-block program: o = x @ w_kn + bias   (f32 accumulation on MXU).
    acc = jnp.dot(x_ref[...], w_ref[...], preferred_element_type=jnp.float32)
    o_ref[...] = (acc + b_ref[...].astype(jnp.float32)).astype(o_ref.dtype)


def _fa_linear_tiled_kernel_f32out(x_ref, w_ref, b_ref, o_ref):
    # Output dtype is f32: o_ref itself is the accumulator (resident across k).
    k = pl.program_id(2)

    @pl.when(k == 0)
    def _init():
        o_ref[...] = jnp.broadcast_to(
            b_ref[...].astype(jnp.float32), o_ref.shape
        )

    o_ref[...] += jnp.dot(
        x_ref[...], w_ref[...], preferred_element_type=jnp.float32
    )


def _fa_linear_tiled_kernel_acc(x_ref, w_ref, b_ref, o_ref, acc_ref):
    # Narrow output dtype: accumulate in an f32 VMEM scratch, cast at the end.
    k = pl.program_id(2)

    @pl.when(k == 0)
    def _init():
        acc_ref[...] = jnp.broadcast_to(
            b_ref[...].astype(jnp.float32), acc_ref.shape
        )

    acc_ref[...] += jnp.dot(
        x_ref[...], w_ref[...], preferred_element_type=jnp.float32
    )

    @pl.when(k == pl.num_programs(2) - 1)
    def _done():
        o_ref[...] = acc_ref[...].astype(o_ref.dtype)


# ----------------------------- wrapper ---------------------------------------


def make_fa_linear(weight, bias=None, compute_dtype=None):
    """One-time parameter prep for the FALinear forward pass.

    weight: (out_features, in_features), as in the PyTorch module.
    bias:   (out_features,) or None.
    compute_dtype: optional cast (e.g. jnp.bfloat16) for x/weight; matmul still
                   accumulates in f32 inside the kernel.

    Returns a jitted fwd(x) computing x @ weight.T + bias with Pallas.
    The weight transpose / padding happens here, once, not per call.
    """
    N, K = weight.shape
    if bias is None:
        bias = jnp.zeros((N,), weight.dtype)
    if compute_dtype is not None:
        weight = weight.astype(compute_dtype)
        bias = bias.astype(compute_dtype)

    small_kn = (K <= _MAX_TILE) and (N <= _MAX_TILE)

    if small_kn:
        # Exact (K, N) transposed weight, no padding needed (full-dim blocks).
        w_kn = weight.T
        b2d = bias.reshape(1, N)
        K_p, N_p = K, N
    else:
        # Pad K/N to multiples of 256 once so tk/tn never fall back to 128.
        K_p = _round_up(K, _MXU)
        N_p = _round_up(N, _MXU)
        w_kn = weight.T
        if (K_p, N_p) != (K, N):
            w_kn = jnp.pad(w_kn, ((0, K_p - K), (0, N_p - N)))
        b2d = bias.reshape(1, N)
        if N_p != N:
            b2d = jnp.pad(b2d, ((0, 0), (0, N_p - N)))

    def fwd(x):
        B, Kx = x.shape
        assert Kx == K, f"expected {K} input features, got {Kx}"
        if compute_dtype is not None:
            x = x.astype(compute_dtype)
        out_dtype = x.dtype

        # ---------------- single-block fast path ----------------------------
        # Small K/N/B: one program, no grid, no scratch, no pad, no slice.
        if small_kn and B <= _MAX_TILE:
            return pl.pallas_call(
                _fa_linear_single_kernel,
                out_shape=jax.ShapeDtypeStruct((B, N), out_dtype),
            )(x, w_kn, b2d)

        # ---------------- batch-tiled path (small K/N, large B) -------------
        if small_kn:
            tm = _MAX_TILE
            B_p = _round_up(B, tm)
            x_p = x if B_p == B else jnp.pad(x, ((0, B_p - B), (0, 0)))
            out = pl.pallas_call(
                _fa_linear_single_kernel,
                out_shape=jax.ShapeDtypeStruct((B_p, N), out_dtype),
                grid_spec=pltpu.PrefetchScalarGridSpec(
                    num_scalar_prefetch=0,
                    grid=(B_p // tm,),
                    in_specs=[
                        pl.BlockSpec((tm, K), lambda i: (i, 0)),
                        pl.BlockSpec((K, N), lambda i: (0, 0)),  # resident
                        pl.BlockSpec((1, N), lambda i: (0, 0)),
                    ],
                    out_specs=pl.BlockSpec((tm, N), lambda i: (i, 0)),
                ),
                compiler_params=pltpu.CompilerParams(
                    dimension_semantics=("parallel",),
                ),
            )(x_p, w_kn, b2d)
            return out if B_p == B else out[:B]

        # ---------------- general tiled path (K or N > 512) -----------------
        sub = _sublane(out_dtype)
        if B <= _MAX_TILE:
            tm = _round_up(B, sub)
            B_p = tm
        else:
            tm = _MAX_TILE
            B_p = _round_up(B, tm)
        tk = _MAX_TILE if K_p % _MAX_TILE == 0 else _MXU
        tn = _MAX_TILE if N_p % _MAX_TILE == 0 else _MXU
        # v7x (2 TCs): keep at least one "parallel" axis with >= 2 blocks.
        if B_p // tm == 1 and N_p // tn == 1 and N_p > _MXU:
            tn = _MXU

        x_p = x
        if (B_p, K_p) != (B, K):
            x_p = jnp.pad(x, ((0, B_p - B), (0, K_p - K)))

        grid = (B_p // tm, N_p // tn, K_p // tk)

        out_is_f32 = jnp.dtype(out_dtype) == jnp.dtype(jnp.float32)
        kernel = (
            _fa_linear_tiled_kernel_f32out
            if out_is_f32
            else _fa_linear_tiled_kernel_acc
        )
        scratch = [] if out_is_f32 else [pltpu.VMEM((tm, tn), jnp.float32)]

        in_bytes = jnp.dtype(x_p.dtype).itemsize
        out_bytes = jnp.dtype(out_dtype).itemsize
        # Double-buffered input/output tiles (+ scratch accumulator if any).
        vmem_bytes = (
            2 * (tm * tk + tk * tn + tn) * in_bytes
            + 2 * tm * tn * out_bytes
            + (0 if out_is_f32 else tm * tn * 4)
        )
        vmem_limit = int(min(100 << 20, max(vmem_bytes + (8 << 20), 24 << 20)))

        cost = pl.CostEstimate(
            flops=2 * B * N * K,
            transcendentals=0,
            bytes_accessed=(B * K + K * N + N) * in_bytes + B * N * out_bytes,
        )

        out = pl.pallas_call(
            kernel,
            out_shape=jax.ShapeDtypeStruct((B_p, N_p), out_dtype),
            grid_spec=pltpu.PrefetchScalarGridSpec(
                num_scalar_prefetch=0,
                grid=grid,
                in_specs=[
                    pl.BlockSpec((tm, tk), lambda i, j, k: (i, k)),
                    pl.BlockSpec((tk, tn), lambda i, j, k: (k, j)),
                    pl.BlockSpec((1, tn), lambda i, j, k: (0, j)),
                ],
                out_specs=pl.BlockSpec((tm, tn), lambda i, j, k: (i, j)),
                scratch_shapes=scratch,
            ),
            compiler_params=pltpu.CompilerParams(
                dimension_semantics=("parallel", "parallel", "arbitrary"),
                vmem_limit_bytes=vmem_limit,
            ),
            cost_estimate=cost,
        )(x_p, w_kn, b2d)

        if (B_p, N_p) != (B, N):
            out = out[:B, :N]
        return out

    return jax.jit(fwd)


if __name__ == "__main__":
    key = jax.random.PRNGKey(0)

    # ---- test 1: module-sized shapes (fast path), batch=8, in=32, out=16 ----
    batch, in_f, out_f = 8, 32, 16
    k_x, k_w, k_wfa, k_b, key = jax.random.split(key, 5)
    x = jax.random.normal(k_x, (batch, in_f), dtype=jnp.float32)
    weight = jax.random.normal(k_w, (out_f, in_f), dtype=jnp.float32) * (
        1.0 / jnp.sqrt(in_f)
    )
    # weight_fa exists in the module but is unused in forward (parity only).
    weight_fa = jax.random.normal(k_wfa, (out_f, in_f), dtype=jnp.float32)
    bias = jax.random.normal(k_b, (out_f,), dtype=jnp.float32) * 0.1

    fwd = make_fa_linear(weight, bias)
    out = jax.block_until_ready(fwd(x))
    ref = (
        jnp.dot(x, weight.T, precision=jax.lax.Precision.HIGHEST)
        + bias[None, :]
    )
    assert out.shape == (batch, out_f)
    assert jnp.allclose(out, ref, atol=1e-4, rtol=1e-4)

    # ---- test 2: exercise the general tiled path (K, N padding + k-loop) ----
    batch2, in_f2, out_f2 = 24, 800, 300
    k_x2, k_w2, k_b2, key = jax.random.split(key, 4)
    x2 = jax.random.normal(k_x2, (batch2, in_f2), dtype=jnp.float32)
    weight2 = jax.random.normal(k_w2, (out_f2, in_f2), dtype=jnp.float32) * (
        1.0 / jnp.sqrt(in_f2)
    )
    bias2 = jax.random.normal(k_b2, (out_f2,), dtype=jnp.float32) * 0.1

    fwd2 = make_fa_linear(weight2, bias2)
    out2 = jax.block_until_ready(fwd2(x2))
    ref2 = (
        jnp.dot(x2, weight2.T, precision=jax.lax.Precision.HIGHEST)
        + bias2[None, :]
    )
    assert out2.shape == (batch2, out_f2)
    assert jnp.allclose(out2, ref2, atol=2e-3, rtol=2e-3)

    print("KERNEL_OK")
</pallas_src>

<mosaic_0001>
module attributes {stable_mosaic.version = 11 : i64} {
  func.func @_fa_linear_single_kernel(%arg0: memref<8x32xf32, #tpu.memory_space<vmem>>, %arg1: memref<32x16xf32, #tpu.memory_space<vmem>>, %arg2: memref<1x16xf32, #tpu.memory_space<vmem>>, %arg3: memref<8x16xf32, #tpu.memory_space<vmem>>) attributes {dimension_semantics = [], scalar_prefetch = 0 : i64, scratch_operands = 0 : i64, tpu.core_type = #tpu.core_type<tc>} {
    %c0 = arith.constant 0 : index
    %c0_0 = arith.constant 0 : index
    %0 = vector.load %arg0[%c0, %c0_0] : memref<8x32xf32, #tpu.memory_space<vmem>>, vector<8x32xf32>
    %c0_1 = arith.constant 0 : index
    %c0_2 = arith.constant 0 : index
    %1 = vector.load %arg1[%c0_1, %c0_2] : memref<32x16xf32, #tpu.memory_space<vmem>>, vector<32x16xf32>
    %cst = arith.constant dense<0.000000e+00> : vector<8x16xf32>
    %2 = tpu.matmul %0, %1, %cst {dimension_numbers = #tpu.dot_dimension_numbers<[1], [0], [0], [1], [0, 0, 1, 1], [], []>} : vector<8x32xf32>, vector<32x16xf32>, vector<8x16xf32> -> vector<8x16xf32>
    %c0_3 = arith.constant 0 : index
    %c0_4 = arith.constant 0 : index
    %3 = vector.load %arg2[%c0_3, %c0_4] : memref<1x16xf32, #tpu.memory_space<vmem>>, vector<1x16xf32>
    %4 = vector.broadcast %3 : vector<1x16xf32> to vector<8x16xf32>
    %5 = arith.addf %2, %4 : vector<8x16xf32>
    %c0_5 = arith.constant 0 : index
    %c0_6 = arith.constant 0 : index
    %6 = vector.load %arg3[%c0_5, %c0_6] : memref<8x16xf32, #tpu.memory_space<vmem>>, vector<8x16xf32>
    tpu.vector_store %arg3[%c0_5, %c0_6], %5 {strides = array<i32>} : memref<8x16xf32, #tpu.memory_space<vmem>>, vector<8x16xf32>,
    return
  }
}

</mosaic_0001>

<llo_original>
// kernel: fwd.1
$region0: #{fwd.1}
  #allocation0 [shape = 'u32[]', space=smem, size = 0x4, offset = 0x4, fixed_abs, tag = 'smem constant byte address 0x4 - core index']
  #allocation1 [shape = 'u32[144,128]{1,0:T(1,128)}', space=vmem, size = 0x12000, scoped, tag = 'internal scratch']
  %s0 = inlined_call_operand.hbm [shape: f32[8,32], index: 0, kind: input, shape index: {}]
  %s1 = inlined_call_operand.hbm [shape: f32[32,16], index: 1, kind: input, shape index: {}]
  %s2 = inlined_call_operand.vmem [shape: f32[1,16], index: 2, kind: input, shape index: {}]
  %s3 = inlined_call_operand.hbm [shape: f32[8,16], index: 3, kind: output, shape index: {}]
  %s4 = sld [smem:[#allocation0]]
  $region30: #{fwd.1} parent=0
    _
  %s6 = ssub.s32 1, %s4
  %s7 = scalar_select 0, %s6, %s4
  $region1: #{fwd.1} parent=0
    #allocation2 [shape = 'u8[4096]{0}', space=vmem, size = 0x1000, scoped, tag = 'input window, operand 0, single buffered']
    #allocation3 [shape = 's32[1]{0}', space=sflag, size = 0x4, scoped, tag = 'scoped memory for fwd.1']
    #allocation4 [shape = 's32[1]{0}', space=sflag, size = 0x4, scoped, tag = 'scoped memory for fwd.1']
    #allocation5 [shape = 'u8[16384]{0}', space=vmem, size = 0x4000, scoped, tag = 'input window, operand 1, single buffered']
    #allocation6 [shape = 's32[1]{0}', space=sflag, size = 0x4, scoped, tag = 'scoped memory for fwd.1']
    #allocation7 [shape = 'u8[4096]{0}', space=vmem, size = 0x1000, scoped, tag = 'output window, operand 0, single buffered']
    %8 = vsyncpa [#allocation3], 0
    %9 = vsyncpa [#allocation6], 0
    %10 = vsyncpa [#allocation4], 0
    // Predicated region
    $region2: #{fwd.1} parent=1 // pred_check
      _
    $region3: #{fwd.1} parent=1 // pred_check_branch
      %12 = sbr.rel (0) target = $region5
    $region4: #{fwd.1} parent=1 // pred_region
      %s14 = ssub.s32 128, 128
      %15 = vsyncadd [#allocation3], %s14
      %s17 = sshll.u32 [#allocation2], 4
      %s18 = int_to_ptr.vmem [resolvable:$true] %s17
      %20 = dma.hbm_to_vmem [thread:$0]  %s0, 128, %s18, [#allocation3]
    $region5: #{fwd.1} parent=1 // pred_fallthru
      _
    // Predicated region
    $region6: #{fwd.1} parent=1 // pred_check
      _
    $region7: #{fwd.1} parent=1 // pred_check_branch
      %22 = sbr.rel (0) target = $region9
    $region8: #{fwd.1} parent=1 // pred_region
      %s24 = ssub.s32 512, 512
      %25 = vsyncadd [#allocation6], %s24
      %s26 = sshll.u32 [#allocation5], 4
      %s27 = int_to_ptr.vmem [resolvable:$true] %s26
      %32 = dma.hbm_to_vmem [thread:$0]  %s1, 512, %s27, [#allocation6], 128, 128, 8
    $region9: #{fwd.1} parent=1 // pred_fallthru
      _
    // Predicated region
    $region10: #{fwd.1} parent=1 // pred_check
      _
    $region11: #{fwd.1} parent=1 // pred_check_branch
      %34 = sbr.rel (0) target = $region13
    $region12: #{fwd.1} parent=1 // pred_region
      _
    $region13: #{fwd.1} parent=1 // pred_fallthru
      _
    // Predicated region
    $region14: #{fwd.1} parent=1 // pred_check
      _
    $region15: #{fwd.1} parent=1 // pred_check_branch
      %36 = sbr.rel (0) target = $region17
    $region16: #{fwd.1} parent=1 // pred_region
      %37 = dma.done [#allocation3], 128
    $region17: #{fwd.1} parent=1 // pred_fallthru
      _
    // Predicated region
    $region18: #{fwd.1} parent=1 // pred_check
      _
    $region19: #{fwd.1} parent=1 // pred_check_branch
      %39 = sbr.rel (0) target = $region21
    $region20: #{fwd.1} parent=1 // pred_region
      %40 = dma.done [#allocation6], 512
    $region21: #{fwd.1} parent=1 // pred_fallthru
      _
    %v41 = vld [vmem:[#allocation2] sm:$0xff]
    %v42 = vld [vmem:[#allocation5] sm:$0xff]
    %v43 = vld [vmem:[#allocation5 + $0x8] sm:$0xff]
    %v44 = vld [vmem:[#allocation5 + $0x10] sm:$0xff]
    %v45 = vld [vmem:[#allocation5 + $0x18] sm:$0xff]
    %v46 = vld [vmem:[%s2] sm:$0x1]
    %v48 = vlaneseq
    %v49 = vshrl.u32 %v48, 7
    %v50 = vsub.s32 0, %v49
    %v51 = vrot.slane %v46, %v50
    %vm53 = vcmask 261120
    %v55 = vsel %vm53, %v41, 0
    %57 = vmatprep.subr.mxu0 0.0
    %58 = vmatpush1.msra.mxu0 %v42
    %59 = vmatprep.subr.mxu0 0.0
    %60 = vmatpush1.msra.mxu0 %v43
    %61 = vmatprep.subr.mxu0 0.0
    %62 = vmatpush1.msra.mxu0 %v44
    %63 = vmatprep.subr.mxu0 0.0
    %64 = vmatpush1.msra.mxu0 %v45
    %65 = vmatprep.subr.mxu0 0.0
    %66 = vmatpush1.msra.mxu0 0.0
    %67 = vmatprep.subr.mxu0 0.0
    %68 = vmatpush1.msra.mxu0 0.0
    %69 = vmatprep.subr.mxu0 0.0
    %70 = vmatpush1.msra.mxu0 0.0
    %71 = vmatprep.subr.mxu0 0.0
    %72 = vmatpush1.msra.mxu0 0.0
    %73 = vmatprep.subr.mxu0 0.0
    %74 = vmatpush1.msra.mxu0 0.0
    %75 = vmatprep.subr.mxu0 0.0
    %76 = vmatpush1.msra.mxu0 0.0
    %77 = vmatprep.subr.mxu0 0.0
    %78 = vmatpush1.msra.mxu0 0.0
    %79 = vmatprep.subr.mxu0 0.0
    %80 = vmatpush1.msra.mxu0 0.0
    %81 = vmatprep.subr.mxu0 0.0
    %82 = vmatpush1.msra.mxu0 0.0
    %83 = vmatprep.subr.mxu0 0.0
    %84 = vmatpush1.msra.mxu0 0.0
    %85 = vmatprep.subr.mxu0 0.0
    %86 = vmatpush1.msra.mxu0 0.0
    %87 = vmatprep.subr.mxu0 0.0
    %88 = vmatpush1.msra.mxu0 0.0
    %89 = vmatprep.subr.mxu0 0.0
    %90 = vmatpush1.msra.mxu0 0.0
    %91 = vmatprep.subr.mxu0 0.0
    %92 = vmatpush1.msra.mxu0 0.0
    %93 = vmatprep.subr.mxu0 0.0
    %94 = vmatpush1.msra.mxu0 0.0
    %95 = vmatprep.subr.mxu0 0.0
    %96 = vmatpush1.msra.mxu0 0.0
    %97 = vmatprep.subr.mxu0 0.0
    %98 = vmatpush1.msra.mxu0 0.0
    %99 = vmatprep.subr.mxu0 0.0
    %100 = vmatpush1.msra.mxu0 0.0
    %101 = vmatprep.subr.mxu0 0.0
    %102 = vmatpush1.msra.mxu0 0.0
    %103 = vmatprep.subr.mxu0 0.0
    %104 = vmatpush1.msra.mxu0 0.0
    %105 = vmatprep.subr.mxu0 0.0
    %106 = vmatpush1.msra.mxu0 0.0
    %107 = vmatprep.subr.mxu0 0.0
    %108 = vmatpush1.msra.mxu0 0.0
    %109 = vmatprep.subr.mxu0 0.0
    %110 = vmatpush1.msra.mxu0 0.0
    %111 = vmatprep.subr.mxu0 0.0
    %112 = vmatpush1.msra.mxu0 0.0
    %113 = vmatprep.subr.mxu0 0.0
    %114 = vmatpush1.msra.mxu0 0.0
    %115 = vmatprep.subr.mxu0 0.0
    %116 = vmatpush1.msra.mxu0 0.0
    %117 = vmatprep.subr.mxu0 0.0
    %118 = vmatpush1.msra.mxu0 0.0
    %119 = vmatprep.subr.mxu0 0.0
    %120 = vmatpush1.msra.mxu0 0.0
    %121 = vmatprep.mubr.f32.mxu0 0.0
    %122 = vmatmul.mubr.f32.gmra.mrb[0].mxu0 %v55
    %v123 = vpop.f32.mrb[0].mxu0
    %v124 = vadd.f32 %v51, %v123
    %v125 = vpop.f32.mrb[0].mxu0
    %126 = vdwg.mxu0
    %vm127 = vcmask 130048
    %128 = vst.msk [vmem:[#allocation7] sm:$0xff] %vm127, %v124
    // Predicated region
    $region22: #{fwd.1} parent=1 // pred_check
      _
    $region23: #{fwd.1} parent=1 // pred_check_branch
      %130 = sbr.rel (0) target = $region25
    $region24: #{fwd.1} parent=1 // pred_region
      %s132 = ssub.s32 128, 128
      %133 = vsyncadd [#allocation4], %s132
      %s135 = sshll.u32 [#allocation7], 4
      %s136 = int_to_ptr.vmem [resolvable:$true] %s135
      %138 = dma.vmem_to_hbm [thread:$0]  %s136, 128, %s3, [#allocation4]
    $region25: #{fwd.1} parent=1 // pred_fallthru
      _
    // Predicated region
    $region26: #{fwd.1} parent=1 // pred_check
      _
    $region27: #{fwd.1} parent=1 // pred_check_branch
      %140 = sbr.rel (0) target = $region29
    $region28: #{fwd.1} parent=1 // pred_region
      %141 = dma.done [#allocation4], 128
    $region29: #{fwd.1} parent=1 // pred_fallthru
      _
    %142 = vsyncpa [#allocation3], 1
    %143 = vsyncpa [#allocation6], 1
    %144 = vsyncpa [#allocation4], 1

</llo_original>
